<compile_context>
chip_gen: v5e
topology: v5e:2x2
jax: 0.10.0
libtpu: 0.0.40
codegen_flags: <defaults>
</compile_context>

<pallas_src>
import jax
import jax.numpy as jnp
from jax.experimental import pallas as pl
from jax.experimental.pallas import tpu as pltpu

_LANES = 128


def _round_up(x: int, m: int) -> int:
    return ((x + m - 1) // m) * m


def _link_pred_kernel(z_ref, w_ref, b_ref, o_ref):
    # z_ref: (TM, K) VMEM tile, w_ref: (K, P) VMEM (resident),
    # b_ref: (1, 1) f32 SMEM scalar, o_ref: (TM, P) VMEM tile.
    acc = jnp.dot(z_ref[...], w_ref[...], preferred_element_type=jnp.float32)
    o_ref[...] = (acc + b_ref[0, 0]).astype(o_ref.dtype)


def link_pred_forward(z, weight, bias, *, block_rows=None):
    """z: (N, C), weight: (1, C) (PyTorch Linear layout), bias: (1,) -> (N,)."""
    N, C = z.shape
    w_flat = weight.reshape(C).astype(z.dtype)
    b = bias.reshape(1, 1).astype(jnp.float32)   # scalar, held in SMEM

    itemsize = jnp.dtype(z.dtype).itemsize
    # Minimum sublane multiple for dense tiling of this dtype (8 f32, 16 bf16).
    sub = max(8, 32 // itemsize)

    # ---------- channel repack: (N, C) -> (rows, pack*C == 128) -------------
    pack = _LANES // C if (C < _LANES and _LANES % C == 0) else 1

    if pack > 1:
        # Pad N so packed rows are a multiple of the sublane tile (zero rows
        # contribute bias-only garbage that is sliced off below).
        n_pad = _round_up(N, pack * sub)
        z_in = jnp.pad(z, ((0, n_pad - N), (0, 0))) if n_pad != N else z
        rows = n_pad // pack
        z2d = z_in.reshape(rows, pack * C)            # free row-major reshape
        # Block-diagonal weight: W[j*C + c, j] = w[c].
        eye = jnp.eye(pack, dtype=z.dtype)
        w2d = (w_flat.reshape(1, C, 1) * eye.reshape(pack, 1, pack)
               ).reshape(pack * C, pack)
        out_cols = pack
    else:
        # TODO(synk): C not dividing 128 -> plain (N,C)@(C,1); lanes are padded.
        rows = N
        z2d = z
        w2d = w_flat.reshape(C, 1)
        out_cols = 1

    k_dim = z2d.shape[1]

    # ---------- tile sizing from PADDED bytes --------------------------------
    z_row_bytes = _round_up(k_dim, _LANES) * itemsize     # lane-padded z row
    # (output row also pads to 128 lanes -> ~_LANES*itemsize/row; same order)
    if block_rows is None:
        target_buf_bytes = 1 << 20                        # ~1 MiB per z buffer
        block_rows = max(sub, target_buf_bytes // z_row_bytes)
    tm = int(block_rows)
    # Keep >= ~8 grid steps when rows allow it (v7x megacore + overlap).
    tm = min(tm, max(sub, _round_up(-(-rows // 8), sub)))
    tm = min(tm, _round_up(rows, sub))
    tm = _round_up(max(tm, sub), sub)
    grid = (pl.cdiv(rows, tm),)

    cost = pl.CostEstimate(
        flops=2 * rows * k_dim * out_cols,
        transcendentals=0,
        bytes_accessed=(rows * k_dim * itemsize
                        + k_dim * out_cols * itemsize
                        + rows * out_cols * itemsize),
    )

    out2d = pl.pallas_call(
        _link_pred_kernel,
        out_shape=jax.ShapeDtypeStruct((rows, out_cols), z.dtype),
        grid_spec=pltpu.PrefetchScalarGridSpec(
            num_scalar_prefetch=0,
            grid=grid,
            in_specs=[
                # z streamed tile-by-tile over rows (double-buffered by Pallas).
                pl.BlockSpec((tm, k_dim), lambda i: (i, 0)),
                # Weight: constant index_map -> fetched once, stays resident.
                pl.BlockSpec((k_dim, out_cols), lambda i: (0, 0)),
                # Bias: scalar in SMEM (no VMEM buffer / per-tile DMA).
                pl.BlockSpec(memory_space=pltpu.MemorySpace.SMEM),
            ],
            out_specs=pl.BlockSpec((tm, out_cols), lambda i: (i, 0)),
        ),
        compiler_params=pltpu.CompilerParams(
            # Rows are independent -> parallel axis (sharded across v7x's two
            # TensorCores; neutral on v5e/v6e).  No cross-row reduction, so a
            # ragged trailing block is safe.
            dimension_semantics=("parallel",),
        ),
        cost_estimate=cost,
    )(z2d, w2d, b)

    # (rows, pack) row-major flatten == original row order; drop padding rows.
    # Matches torch's .squeeze() for N > 1 (N == 1 returns shape (1,) instead
    # of torch's 0-D scalar; edge case only).
    return out2d.reshape(-1)[:N]


if __name__ == "__main__":
    key = jax.random.PRNGKey(0)
    k_z, k_w, k_b, k_z2, k_z3, k_w3, k_b3, k_z4 = jax.random.split(key, 8)

    # in_channel = 32 (consistent with the module); torch.nn.Linear default
    # init: uniform(-1/sqrt(in_channel), 1/sqrt(in_channel)).
    C = 32
    bound = 1.0 / jnp.sqrt(jnp.float32(C))
    weight = jax.random.uniform(k_w, (1, C), jnp.float32, -bound, bound)
    bias = jax.random.uniform(k_b, (1,), jnp.float32, -bound, bound)

    # 1) Small single-tile case, packed path (C=32 -> pack=4).
    N = 8
    z = jax.random.normal(k_z, (N, C), jnp.float32)
    out = jax.block_until_ready(link_pred_forward(z, weight, bias))
    ref = jnp.squeeze(z @ weight.T + bias, axis=-1)
    assert out.shape == (N,), out.shape
    assert jnp.allclose(out, ref, atol=1e-5, rtol=1e-5), "mismatch vs reference"

    # 2) Multi-tile packed path + N padding (52 -> 64 rows pre-pack).
    N2 = 52
    z2 = jax.random.normal(k_z2, (N2, C), jnp.float32)
    out2 = jax.block_until_ready(link_pred_forward(z2, weight, bias, block_rows=8))
    ref2 = jnp.squeeze(z2 @ weight.T + bias, axis=-1)
    assert out2.shape == (N2,), out2.shape
    assert jnp.allclose(out2, ref2, atol=1e-5, rtol=1e-5), "tiled mismatch"

    # 3) Fallback path: C = 48 does not divide 128.
    C3, N3 = 48, 40
    bound3 = 1.0 / jnp.sqrt(jnp.float32(C3))
    weight3 = jax.random.uniform(k_w3, (1, C3), jnp.float32, -bound3, bound3)
    bias3 = jax.random.uniform(k_b3, (1,), jnp.float32, -bound3, bound3)
    z3 = jax.random.normal(k_z3, (N3, C3), jnp.float32)
    out3 = jax.block_until_ready(link_pred_forward(z3, weight3, bias3))
    ref3 = jnp.squeeze(z3 @ weight3.T + bias3, axis=-1)
    assert out3.shape == (N3,), out3.shape
    assert jnp.allclose(out3, ref3, atol=1e-5, rtol=1e-5), "fallback mismatch"

    # 4) bf16 streaming path (f32 accumulation inside the kernel).
    N4 = 64
    z4 = jax.random.normal(k_z4, (N4, C), jnp.float32).astype(jnp.bfloat16)
    out4 = jax.block_until_ready(
        link_pred_forward(z4, weight, bias)).astype(jnp.float32)
    ref4 = jnp.squeeze(z4.astype(jnp.float32)
                       @ weight.astype(jnp.bfloat16).astype(jnp.float32).T
                       + bias, axis=-1)
    assert out4.shape == (N4,), out4.shape
    assert jnp.allclose(out4, ref4, atol=5e-2, rtol=5e-2), "bf16 mismatch"

    print("KERNEL_OK")
</pallas_src>

<mosaic_0001>
module attributes {stable_mosaic.version = 11 : i64} {
  func.func @_link_pred_kernel(%arg0: i32, %arg1: memref<8x128xf32, #tpu.memory_space<vmem>>, %arg2: memref<128x4xf32, #tpu.memory_space<vmem>>, %arg3: memref<1x1xf32, #tpu.memory_space<smem>>, %arg4: memref<8x4xf32, #tpu.memory_space<vmem>>) attributes {dimension_semantics = [#tpu.dimension_semantics<parallel>], iteration_bounds = array<i64: 1>, scalar_prefetch = 0 : i64, scratch_operands = 0 : i64, tpu.core_type = #tpu.core_type<tc>, window_params = [{transform_indices = @transform_0, window_bounds = array<i64: 8, 128>}, {pipeline_mode = #tpu.pipeline_mode<synchronous>, transform_indices = @transform_1, window_bounds = array<i64: 128, 4>}, {transform_indices = @transform_2, window_bounds = array<i64: 1, 1>}, {transform_indices = @transform_3, window_bounds = array<i64: 8, 4>}]} {
    %c0 = arith.constant 0 : index
    %c0_0 = arith.constant 0 : index
    %0 = vector.load %arg1[%c0, %c0_0] : memref<8x128xf32, #tpu.memory_space<vmem>>, vector<8x128xf32>
    %c0_1 = arith.constant 0 : index
    %c0_2 = arith.constant 0 : index
    %1 = vector.load %arg2[%c0_1, %c0_2] : memref<128x4xf32, #tpu.memory_space<vmem>>, vector<128x4xf32>
    %cst = arith.constant dense<0.000000e+00> : vector<8x4xf32>
    %2 = tpu.matmul %0, %1, %cst {dimension_numbers = #tpu.dot_dimension_numbers<[1], [0], [0], [1], [0, 0, 1, 1], [], []>} : vector<8x128xf32>, vector<128x4xf32>, vector<8x4xf32> -> vector<8x4xf32>
    %c0_3 = arith.constant 0 : index
    %c0_4 = arith.constant 0 : index
    %3 = memref.load %arg3[%c0_3, %c0_4] : memref<1x1xf32, #tpu.memory_space<smem>>
    %4 = vector.broadcast %3 : f32 to vector<8x4xf32>
    %5 = arith.addf %2, %4 : vector<8x4xf32>
    %c0_5 = arith.constant 0 : index
    %c0_6 = arith.constant 0 : index
    %6 = vector.load %arg4[%c0_5, %c0_6] : memref<8x4xf32, #tpu.memory_space<vmem>>, vector<8x4xf32>
    tpu.vector_store %arg4[%c0_5, %c0_6], %5 {strides = array<i32>} : memref<8x4xf32, #tpu.memory_space<vmem>>, vector<8x4xf32>,
    return
  }
  func.func @transform_0(%arg0: i32) -> (i32, i32) {
    %c0_i32 = arith.constant 0 : i32
    %c0_i32_0 = arith.constant 0 : i32
    return %arg0, %c0_i32 : i32, i32
  }
  func.func @transform_1(%arg0: i32) -> (i32, i32) {
    %c0_i32 = arith.constant 0 : i32
    %c0_i32_0 = arith.constant 0 : i32
    %c0_i32_1 = arith.constant 0 : i32
    return %c0_i32, %c0_i32_0 : i32, i32
  }
  func.func @transform_2(%arg0: i32) -> (i32, i32) {
    %c0_i32 = arith.constant 0 : i32
    %c0_i32_0 = arith.constant 0 : i32
    %c0_i32_1 = arith.constant 0 : i32
    return %c0_i32, %c0_i32_0 : i32, i32
  }
  func.func @transform_3(%arg0: i32) -> (i32, i32) {
    %c0_i32 = arith.constant 0 : i32
    %c0_i32_0 = arith.constant 0 : i32
    return %arg0, %c0_i32 : i32, i32
  }
}

</mosaic_0001>

<llo_original>
// kernel: tpu_custom_call.1
$region0: #{tpu_custom_call.1}
  #allocation0 [shape = 'u32[]', space=smem, size = 0x4, offset = 0x4, fixed_abs, tag = 'smem constant byte address 0x4 - core index']
  #allocation1 [shape = 'u32[72,128]{1,0:T(1,128)}', space=vmem, size = 0x9000, scoped, tag = 'internal scratch']
  #allocation2 [shape = 'f32[1,1]{1,0:T(1,128)S(6)}', space=smem, size = 0x200, scoped, tag = 'scoped memory for tpu_custom_call.1']
  %s0 = inlined_call_operand.vmem [shape: f32[8,128], index: 0, kind: input, shape index: {}]
  %s1 = inlined_call_operand.vmem [shape: f32[128,4], index: 1, kind: input, shape index: {}]
  %s2 = inlined_call_operand.<no memory space> [shape: f32[1,1], index: 2, kind: input, shape index: {}]
  %s3 = inlined_call_operand.vmem [shape: f32[8,4], index: 3, kind: output, shape index: {}]
  %s4 = sld [smem:[#allocation0]]
  $region22: #{tpu_custom_call.1} parent=0
    _
  %s6 = ssub.s32 1, %s4
  %s7 = scalar_select 0, %s6, %s4
  %8 = sst [smem:[#allocation2]] %s2
  // Predicated region
  $region2: #{tpu_custom_call.1} parent=0 // pred_check
    _
  $region3: #{tpu_custom_call.1} parent=0 // pred_check_branch
    %10 = sbr.rel (0) target = $region5
  $region4: #{tpu_custom_call.1} parent=0 // pred_region
    _
  $region5: #{tpu_custom_call.1} parent=0 // pred_fallthru
    _
  // Predicated region
  $region6: #{tpu_custom_call.1} parent=0 // pred_check
    _
  $region7: #{tpu_custom_call.1} parent=0 // pred_check_branch
    %12 = sbr.rel (0) target = $region9
  $region8: #{tpu_custom_call.1} parent=0 // pred_region
    _
  $region9: #{tpu_custom_call.1} parent=0 // pred_fallthru
    _
  // Predicated region
  $region10: #{tpu_custom_call.1} parent=0 // pred_check
    _
  $region11: #{tpu_custom_call.1} parent=0 // pred_check_branch
    %14 = sbr.rel (0) target = $region13
  $region12: #{tpu_custom_call.1} parent=0 // pred_region
    _
  $region13: #{tpu_custom_call.1} parent=0 // pred_fallthru
    _
  %v15 = vld [vmem:[%s0] sm:$0xff]
  %v16 = vld [vmem:[%s1] sm:$0xff]
  %v17 = vld [vmem:[%s1 + $0x8] sm:$0xff]
  %v18 = vld [vmem:[%s1 + $0x10] sm:$0xff]
  %v19 = vld [vmem:[%s1 + $0x18] sm:$0xff]
  %v20 = vld [vmem:[%s1 + $0x20] sm:$0xff]
  %v21 = vld [vmem:[%s1 + $0x28] sm:$0xff]
  %v22 = vld [vmem:[%s1 + $0x30] sm:$0xff]
  %v23 = vld [vmem:[%s1 + $0x38] sm:$0xff]
  %v24 = vld [vmem:[%s1 + $0x40] sm:$0xff]
  %v25 = vld [vmem:[%s1 + $0x48] sm:$0xff]
  %v26 = vld [vmem:[%s1 + $0x50] sm:$0xff]
  %v27 = vld [vmem:[%s1 + $0x58] sm:$0xff]
  %v28 = vld [vmem:[%s1 + $0x60] sm:$0xff]
  %v29 = vld [vmem:[%s1 + $0x68] sm:$0xff]
  %v30 = vld [vmem:[%s1 + $0x70] sm:$0xff]
  %v31 = vld [vmem:[%s1 + $0x78] sm:$0xff]
  %s32 = sld [smem:[#allocation2]]
  %v33 = vstv %s32
  %34 = vmatpush.msra.mxu0 %v31
  %35 = vmatpush.msra.mxu0 %v30
  %36 = vmatpush.msra.mxu0 %v29
  %37 = vmatpush.msra.mxu0 %v28
  %38 = vmatpush.msra.mxu0 %v27
  %39 = vmatpush.msra.mxu0 %v26
  %40 = vmatpush.msra.mxu0 %v25
  %41 = vmatpush.msra.mxu0 %v24
  %42 = vmatpush.msra.mxu0 %v23
  %43 = vmatpush.msra.mxu0 %v22
  %44 = vmatpush.msra.mxu0 %v21
  %45 = vmatpush.msra.mxu0 %v20
  %46 = vmatpush.msra.mxu0 %v19
  %47 = vmatpush.msra.mxu0 %v18
  %48 = vmatpush.msra.mxu0 %v17
  %49 = vmatpush.msra.mxu0 %v16
  %50 = vmatmul.f32.gmra.mxu0 %v15
  %v51 = vpop.f32.mrf.mxu0
  %v52 = vadd.f32 %v33, %v51
  %53 = vdwg.mxu0
  %vm54 = vcmask 31744
  %55 = vst.msk [vmem:[%s3] sm:$0xff] %vm54, %v52
  // Predicated region
  $region14: #{tpu_custom_call.1} parent=0 // pred_check
    _
  $region15: #{tpu_custom_call.1} parent=0 // pred_check_branch
    %57 = sbr.rel (0) target = $region17
  $region16: #{tpu_custom_call.1} parent=0 // pred_region
    _
  $region17: #{tpu_custom_call.1} parent=0 // pred_fallthru
    _
  // Predicated region
  $region18: #{tpu_custom_call.1} parent=0 // pred_check
    _
  $region19: #{tpu_custom_call.1} parent=0 // pred_check_branch
    %59 = sbr.rel (0) target = $region21
  $region20: #{tpu_custom_call.1} parent=0 // pred_region
    _
  $region21: #{tpu_custom_call.1} parent=0 // pred_fallthru
    _

</llo_original>
